<compile_context>
chip_gen: v5e
topology: v5e:2x2
jax: 0.10.0
libtpu: 0.0.40
codegen_flags: <defaults>
</compile_context>

<pallas_src>
import math
from functools import partial

import jax
import jax.numpy as jnp
from jax.experimental import pallas as pl
from jax.experimental.pallas import tpu as pltpu


HIDDEN_PAD = 128  # hidden widths (80, 80, 80, 40) and output (1) padded to 128 lanes


def mlp_kernel(x_ref, w_ref, v_ref, o_ref):
    # v_ref rows (f32): [w1_row, b1, b2, b3, b4, b5, 0, 0], each padded to 128 lanes
    w1_row = v_ref[0:1, :]
    b1 = v_ref[1:2, :]
    b2 = v_ref[2:3, :]
    b3 = v_ref[3:4, :]
    b4 = v_ref[4:5, :]
    b5 = v_ref[5:6, :]

    # ---- layer 1: K=1 contraction done on the VPU (broadcast mul + bias), f32 ----
    h = jnp.tanh(x_ref[...] * w1_row + b1)              # (tn, 128) f32

    # ---- layers 2-4: one full-M matmul per layer (single RHS push), bf16 on the
    #      MXU with f32 accumulation; bias add + tanh stay f32 on VPU/EUP. ----
    for li, b in enumerate((b2, b3, b4)):
        y = jnp.dot(h.astype(jnp.bfloat16), w_ref[li],
                    preferred_element_type=jnp.float32) + b
        h = jnp.tanh(y)

    # ---- layer 5 (output, no activation); lane-dense store, only column 0 real ----
    o_ref[...] = jnp.dot(h.astype(jnp.bfloat16), w_ref[3],
                         preferred_element_type=jnp.float32) + b5


def _round_up(a, b):
    return ((a + b - 1) // b) * b


def pack_params(params):
    """Pack the 10 parameters into two VMEM slabs (zero-padded to 128 lanes).

    w_slab: (4, 128, 128) bf16 -> W2, W3, W4, W5   (stored as (in, out))
    v_slab: (8, 128) f32       -> [w1_row, b1, b2, b3, b4, b5, 0, 0]
    Zero padding is exact: padded lanes stay identically zero through every layer.
    Call ONCE per parameter update; pass the slabs to net_forward.
    """
    (w1, b1), (w2, b2), (w3, b3), (w4, b4), (w5, b5) = params

    def pad_w(w):
        out = jnp.zeros((HIDDEN_PAD, HIDDEN_PAD), jnp.float32)
        out = out.at[: w.shape[0], : w.shape[1]].set(w.astype(jnp.float32))
        return out.astype(jnp.bfloat16)

    def pad_v(v):
        out = jnp.zeros((HIDDEN_PAD,), jnp.float32)
        return out.at[: v.size].set(v.reshape(-1).astype(jnp.float32))

    w_slab = jnp.stack([pad_w(w2), pad_w(w3), pad_w(w4), pad_w(w5)])
    zero_row = jnp.zeros((HIDDEN_PAD,), jnp.float32)
    v_slab = jnp.stack(
        [pad_v(w1), pad_v(b1), pad_v(b2), pad_v(b3), pad_v(b4), pad_v(b5),
         zero_row, zero_row]
    )
    return w_slab, v_slab


@partial(jax.jit, static_argnames=("max_tile_n",))
def net_forward(x, w_slab, v_slab, max_tile_n=256):
    n = x.shape[0]

    # Batch tile: multiple of 8 sublanes, capped at max_tile_n.
    # For n=50 this is a single 56-row tile; for larger N the 1-D grid
    # pipelines x/out tiles while the weight slabs stay VMEM-resident.
    tn = min(max_tile_n, _round_up(n, 8))
    n_pad = _round_up(n, tn)
    grid = (n_pad // tn,)

    x_p = jnp.zeros((n_pad, 1), jnp.float32).at[:n, :].set(x.astype(jnp.float32))

    out_padded = pl.pallas_call(
        mlp_kernel,
        out_shape=jax.ShapeDtypeStruct((n_pad, HIDDEN_PAD), jnp.float32),
        grid=grid,
        in_specs=[
            pl.BlockSpec((tn, 1), lambda i: (i, 0)),                          # x tile
            pl.BlockSpec((4, HIDDEN_PAD, HIDDEN_PAD), lambda i: (0, 0, 0)),   # bf16 weights (resident)
            pl.BlockSpec((8, HIDDEN_PAD), lambda i: (0, 0)),                  # w1 row + biases (f32)
        ],
        out_specs=pl.BlockSpec((tn, HIDDEN_PAD), lambda i: (i, 0)),           # lane-dense out
        compiler_params=pltpu.CompilerParams(
            dimension_semantics=("parallel",) if grid[0] > 1 else ("arbitrary",)
        ),
    )(x_p, w_slab, v_slab)

    # Only column 0 of the lane-dense output is meaningful; drop padded rows too.
    return out_padded[:n, :1]


def init_params(key):
    """Deterministic init mirroring the PyTorch module:
    weights ~ Normal(0, 0.1); biases ~ Uniform(-1/sqrt(fan_in), 1/sqrt(fan_in))
    (PyTorch nn.Linear default bias init). Weights stored as (in, out)."""
    dims = [(1, 80), (80, 80), (80, 80), (80, 40), (40, 1)]
    params = []
    for (fan_in, fan_out) in dims:
        key, kw, kb = jax.random.split(key, 3)
        w = 0.1 * jax.random.normal(kw, (fan_in, fan_out), dtype=jnp.float32)
        bound = 1.0 / math.sqrt(fan_in)
        b = jax.random.uniform(kb, (1, fan_out), dtype=jnp.float32,
                               minval=-bound, maxval=bound)
        params.append((w, b))
    return params


def net_forward_ref(x, params):
    h = x
    for i, (w, b) in enumerate(params):
        h = h @ w + b
        if i < len(params) - 1:
            h = jnp.tanh(h)
    return h


if __name__ == "__main__":
    key = jax.random.PRNGKey(0)
    params = init_params(key)

    # Pack once (per parameter update), reuse across forward calls.
    w_slab, v_slab = pack_params(params)

    # Input matching the script:  ix = linspace(0, pi, 50).reshape(50, 1)
    vxn = 50
    x = jnp.linspace(0.0, jnp.pi, vxn, dtype=jnp.float32).reshape(vxn, 1)

    out = net_forward(x, w_slab, v_slab)
    out = jax.block_until_ready(out)

    ref = net_forward_ref(x, params)   # f32 reference
    assert out.shape == (vxn, 1)
    # bf16 matmul operands (f32 accumulation) -> relaxed tolerance vs f32 ref.
    assert jnp.allclose(out, ref, atol=1e-2, rtol=1e-2), (
        float(jnp.max(jnp.abs(out - ref)))
    )

    print("KERNEL_OK")
</pallas_src>

<mosaic_0001>
module attributes {stable_mosaic.version = 11 : i64} {
  func.func @mlp_kernel(%arg0: i32, %arg1: memref<56x1xf32, #tpu.memory_space<vmem>>, %arg2: memref<4x128x128xbf16, #tpu.memory_space<vmem>>, %arg3: memref<8x128xf32, #tpu.memory_space<vmem>>, %arg4: memref<56x128xf32, #tpu.memory_space<vmem>>) attributes {dimension_semantics = [#tpu.dimension_semantics<arbitrary>], iteration_bounds = array<i64: 1>, scalar_prefetch = 0 : i64, scratch_operands = 0 : i64, tpu.core_type = #tpu.core_type<tc>, window_params = [{transform_indices = @transform_0, window_bounds = array<i64: 56, 1>}, {pipeline_mode = #tpu.pipeline_mode<synchronous>, transform_indices = @transform_1, window_bounds = array<i64: 4, 128, 128>}, {pipeline_mode = #tpu.pipeline_mode<synchronous>, transform_indices = @transform_2, window_bounds = array<i64: 8, 128>}, {transform_indices = @transform_3, window_bounds = array<i64: 56, 128>}]} {
    %c0 = arith.constant 0 : index
    %c0_0 = arith.constant 0 : index
    %0 = vector.load %arg3[%c0, %c0_0] : memref<8x128xf32, #tpu.memory_space<vmem>>, vector<1x128xf32>
    %c1 = arith.constant 1 : index
    %c0_1 = arith.constant 0 : index
    %1 = vector.load %arg3[%c1, %c0_1] : memref<8x128xf32, #tpu.memory_space<vmem>>, vector<1x128xf32>
    %c2 = arith.constant 2 : index
    %c0_2 = arith.constant 0 : index
    %2 = vector.load %arg3[%c2, %c0_2] : memref<8x128xf32, #tpu.memory_space<vmem>>, vector<1x128xf32>
    %c3 = arith.constant 3 : index
    %c0_3 = arith.constant 0 : index
    %3 = vector.load %arg3[%c3, %c0_3] : memref<8x128xf32, #tpu.memory_space<vmem>>, vector<1x128xf32>
    %c4 = arith.constant 4 : index
    %c0_4 = arith.constant 0 : index
    %4 = vector.load %arg3[%c4, %c0_4] : memref<8x128xf32, #tpu.memory_space<vmem>>, vector<1x128xf32>
    %c5 = arith.constant 5 : index
    %c0_5 = arith.constant 0 : index
    %5 = vector.load %arg3[%c5, %c0_5] : memref<8x128xf32, #tpu.memory_space<vmem>>, vector<1x128xf32>
    %c0_6 = arith.constant 0 : index
    %c0_7 = arith.constant 0 : index
    %6 = vector.load %arg1[%c0_6, %c0_7] : memref<56x1xf32, #tpu.memory_space<vmem>>, vector<56x1xf32>
    %7 = vector.broadcast %6 : vector<56x1xf32> to vector<56x128xf32>
    %8 = vector.broadcast %0 : vector<1x128xf32> to vector<56x128xf32>
    %9 = arith.mulf %7, %8 : vector<56x128xf32>
    %10 = vector.broadcast %1 : vector<1x128xf32> to vector<56x128xf32>
    %11 = arith.addf %9, %10 : vector<56x128xf32>
    %12 = math.tanh %11 : vector<56x128xf32>
    %13 = arith.truncf %12 : vector<56x128xf32> to vector<56x128xbf16>
    %c0_8 = arith.constant 0 : index
    %c0_9 = arith.constant 0 : index
    %c0_10 = arith.constant 0 : index
    %14 = vector.load %arg2[%c0_8, %c0_9, %c0_10] : memref<4x128x128xbf16, #tpu.memory_space<vmem>>, vector<1x128x128xbf16>
    %15 = vector.shape_cast %14 : vector<1x128x128xbf16> to vector<128x128xbf16>
    %cst = arith.constant dense<0.000000e+00> : vector<56x128xf32>
    %16 = tpu.matmul %13, %15, %cst {dimension_numbers = #tpu.dot_dimension_numbers<[1], [0], [0], [1], [0, 0, 1, 1], [], []>} : vector<56x128xbf16>, vector<128x128xbf16>, vector<56x128xf32> -> vector<56x128xf32>
    %17 = vector.broadcast %2 : vector<1x128xf32> to vector<56x128xf32>
    %18 = arith.addf %16, %17 : vector<56x128xf32>
    %19 = math.tanh %18 : vector<56x128xf32>
    %20 = arith.truncf %19 : vector<56x128xf32> to vector<56x128xbf16>
    %c1_11 = arith.constant 1 : index
    %c0_12 = arith.constant 0 : index
    %c0_13 = arith.constant 0 : index
    %21 = vector.load %arg2[%c1_11, %c0_12, %c0_13] : memref<4x128x128xbf16, #tpu.memory_space<vmem>>, vector<1x128x128xbf16>
    %22 = vector.shape_cast %21 : vector<1x128x128xbf16> to vector<128x128xbf16>
    %cst_14 = arith.constant dense<0.000000e+00> : vector<56x128xf32>
    %23 = tpu.matmul %20, %22, %cst_14 {dimension_numbers = #tpu.dot_dimension_numbers<[1], [0], [0], [1], [0, 0, 1, 1], [], []>} : vector<56x128xbf16>, vector<128x128xbf16>, vector<56x128xf32> -> vector<56x128xf32>
    %24 = vector.broadcast %3 : vector<1x128xf32> to vector<56x128xf32>
    %25 = arith.addf %23, %24 : vector<56x128xf32>
    %26 = math.tanh %25 : vector<56x128xf32>
    %27 = arith.truncf %26 : vector<56x128xf32> to vector<56x128xbf16>
    %c2_15 = arith.constant 2 : index
    %c0_16 = arith.constant 0 : index
    %c0_17 = arith.constant 0 : index
    %28 = vector.load %arg2[%c2_15, %c0_16, %c0_17] : memref<4x128x128xbf16, #tpu.memory_space<vmem>>, vector<1x128x128xbf16>
    %29 = vector.shape_cast %28 : vector<1x128x128xbf16> to vector<128x128xbf16>
    %cst_18 = arith.constant dense<0.000000e+00> : vector<56x128xf32>
    %30 = tpu.matmul %27, %29, %cst_18 {dimension_numbers = #tpu.dot_dimension_numbers<[1], [0], [0], [1], [0, 0, 1, 1], [], []>} : vector<56x128xbf16>, vector<128x128xbf16>, vector<56x128xf32> -> vector<56x128xf32>
    %31 = vector.broadcast %4 : vector<1x128xf32> to vector<56x128xf32>
    %32 = arith.addf %30, %31 : vector<56x128xf32>
    %33 = math.tanh %32 : vector<56x128xf32>
    %34 = arith.truncf %33 : vector<56x128xf32> to vector<56x128xbf16>
    %c3_19 = arith.constant 3 : index
    %c0_20 = arith.constant 0 : index
    %c0_21 = arith.constant 0 : index
    %35 = vector.load %arg2[%c3_19, %c0_20, %c0_21] : memref<4x128x128xbf16, #tpu.memory_space<vmem>>, vector<1x128x128xbf16>
    %36 = vector.shape_cast %35 : vector<1x128x128xbf16> to vector<128x128xbf16>
    %cst_22 = arith.constant dense<0.000000e+00> : vector<56x128xf32>
    %37 = tpu.matmul %34, %36, %cst_22 {dimension_numbers = #tpu.dot_dimension_numbers<[1], [0], [0], [1], [0, 0, 1, 1], [], []>} : vector<56x128xbf16>, vector<128x128xbf16>, vector<56x128xf32> -> vector<56x128xf32>
    %38 = vector.broadcast %5 : vector<1x128xf32> to vector<56x128xf32>
    %39 = arith.addf %37, %38 : vector<56x128xf32>
    %c0_23 = arith.constant 0 : index
    %c0_24 = arith.constant 0 : index
    %40 = vector.load %arg4[%c0_23, %c0_24] : memref<56x128xf32, #tpu.memory_space<vmem>>, vector<56x128xf32>
    tpu.vector_store %arg4[%c0_23, %c0_24], %39 {strides = array<i32>} : memref<56x128xf32, #tpu.memory_space<vmem>>, vector<56x128xf32>,
    return
  }
  func.func @transform_0(%arg0: i32) -> (i32, i32) {
    %c0_i32 = arith.constant 0 : i32
    %c0_i32_0 = arith.constant 0 : i32
    return %arg0, %c0_i32 : i32, i32
  }
  func.func @transform_1(%arg0: i32) -> (i32, i32, i32) {
    %c0_i32 = arith.constant 0 : i32
    %c0_i32_0 = arith.constant 0 : i32
    %c0_i32_1 = arith.constant 0 : i32
    %c0_i32_2 = arith.constant 0 : i32
    return %c0_i32, %c0_i32_0, %c0_i32_1 : i32, i32, i32
  }
  func.func @transform_2(%arg0: i32) -> (i32, i32) {
    %c0_i32 = arith.constant 0 : i32
    %c0_i32_0 = arith.constant 0 : i32
    %c0_i32_1 = arith.constant 0 : i32
    return %c0_i32, %c0_i32_0 : i32, i32
  }
  func.func @transform_3(%arg0: i32) -> (i32, i32) {
    %c0_i32 = arith.constant 0 : i32
    %c0_i32_0 = arith.constant 0 : i32
    return %arg0, %c0_i32 : i32, i32
  }
}

</mosaic_0001>

<llo_original>
// kernel: net_forward.1
$region0: #{net_forward.1}
  #allocation0 [shape = 'u32[]', space=smem, size = 0x4, offset = 0x4, fixed_abs, tag = 'smem constant byte address 0x4 - core index']
  #allocation1 [shape = 'u32[72,128]{1,0:T(1,128)}', space=vmem, size = 0x9000, scoped, tag = 'internal scratch']
  %s0 = inlined_call_operand.vmem [shape: f32[56,1], index: 0, kind: input, shape index: {}]
  %s1 = inlined_call_operand.hbm [shape: bf16[4,128,128], index: 1, kind: input, shape index: {}]
  %s2 = inlined_call_operand.vmem [shape: f32[8,128], index: 2, kind: input, shape index: {}]
  %s3 = inlined_call_operand.vmem [shape: f32[56,128], index: 3, kind: output, shape index: {}]
  %s4 = sld [smem:[#allocation0]]
  $region26: #{net_forward.1} parent=0
    _
  %s6 = ssub.s32 1, %s4
  %s7 = scalar_select 0, %s6, %s4
  $region1: #{net_forward.1} parent=0
    #allocation2 [shape = 'u8[131072]{0}', space=vmem, size = 0x20000, scoped, tag = 'input window, operand 1, single buffered']
    #allocation3 [shape = 's32[1]{0}', space=sflag, size = 0x4, scoped, tag = 'scoped memory for net_forward.1']
    %8 = vsyncpa [#allocation3], 0
    // Predicated region
    $region2: #{net_forward.1} parent=1 // pred_check
      _
    $region3: #{net_forward.1} parent=1 // pred_check_branch
      %10 = sbr.rel (0) target = $region5
    $region4: #{net_forward.1} parent=1 // pred_region
      _
    $region5: #{net_forward.1} parent=1 // pred_fallthru
      _
    // Predicated region
    $region6: #{net_forward.1} parent=1 // pred_check
      _
    $region7: #{net_forward.1} parent=1 // pred_check_branch
      %12 = sbr.rel (0) target = $region9
    $region8: #{net_forward.1} parent=1 // pred_region
      %14 = vsyncadd [#allocation3], 0
      %s15 = sshll.u32 %s1, 4
      %s16 = int_to_ptr.hbm [resolvable:$true] %s15
      %s17 = sshll.u32 [#allocation2], 4
      %s18 = int_to_ptr.vmem [resolvable:$true] %s17
      %23 = dma.hbm_to_vmem [thread:$0]  %s16, 4096, %s18, [#allocation3], 64, 64, 4
    $region9: #{net_forward.1} parent=1 // pred_fallthru
      _
    // Predicated region
    $region10: #{net_forward.1} parent=1 // pred_check
      _
    $region11: #{net_forward.1} parent=1 // pred_check_branch
      %25 = sbr.rel (0) target = $region13
    $region12: #{net_forward.1} parent=1 // pred_region
      _
    $region13: #{net_forward.1} parent=1 // pred_fallthru
      _
    // Predicated region
    $region14: #{net_forward.1} parent=1 // pred_check
      _
    $region15: #{net_forward.1} parent=1 // pred_check_branch
      %27 = sbr.rel (0) target = $region17
    $region16: #{net_forward.1} parent=1 // pred_region
      %29 = dma.done [#allocation3], 4096
    $region17: #{net_forward.1} parent=1 // pred_fallthru
      _
    %v30 = vld [vmem:[%s2] sm:$0x1]
    %v31 = vld [vmem:[%s2 + $0x1] sm:$0x1]
    %v32 = vld [vmem:[%s2 + $0x2] sm:$0x1]
    %v33 = vld [vmem:[%s2 + $0x3] sm:$0x1]
    %v34 = vld [vmem:[%s2 + $0x4] sm:$0x1]
    %v35 = vld [vmem:[%s2 + $0x5] sm:$0x1]
    %v36 = vld [vmem:[%s0] sm:$0xff]
    %v37 = vld [vmem:[%s0 + $0x8] sm:$0xff]
    %v38 = vld [vmem:[%s0 + $0x10] sm:$0xff]
    %v39 = vld [vmem:[%s0 + $0x18] sm:$0xff]
    %v40 = vld [vmem:[%s0 + $0x20] sm:$0xff]
    %v41 = vld [vmem:[%s0 + $0x28] sm:$0xff]
    %v42 = vld [vmem:[%s0 + $0x30] sm:$0xff]
    %44 = vset.pattern.permute.xlu0 0
    %45 = vperm.xlu0 %44, %v36
    %v46 = vpop.permute.xlu0 %45
    %49 = vset.pattern.permute.xlu0 0
    %50 = vperm.xlu0 %49, %v37
    %v51 = vpop.permute.xlu0 %50
    %54 = vset.pattern.permute.xlu0 0
    %55 = vperm.xlu0 %54, %v38
    %v56 = vpop.permute.xlu0 %55
    %59 = vset.pattern.permute.xlu0 0
    %60 = vperm.xlu0 %59, %v39
    %v61 = vpop.permute.xlu0 %60
    %64 = vset.pattern.permute.xlu0 0
    %65 = vperm.xlu0 %64, %v40
    %v66 = vpop.permute.xlu0 %65
    %69 = vset.pattern.permute.xlu0 0
    %70 = vperm.xlu0 %69, %v41
    %v71 = vpop.permute.xlu0 %70
    %74 = vset.pattern.permute.xlu0 0
    %75 = vperm.xlu0 %74, %v42
    %v76 = vpop.permute.xlu0 %75
    %v78 = vperm.slane %v30, 0
    %v79 = vmul.f32 %v46, %v78
    %v80 = vmul.f32 %v51, %v78
    %v81 = vmul.f32 %v56, %v78
    %v82 = vmul.f32 %v61, %v78
    %v83 = vmul.f32 %v66, %v78
    %v84 = vmul.f32 %v71, %v78
    %v85 = vmul.f32 %v76, %v78
    %v86 = vperm.slane %v31, 0
    %v87 = vadd.f32 %v79, %v86
    %v88 = vadd.f32 %v80, %v86
    %v89 = vadd.f32 %v81, %v86
    %v90 = vadd.f32 %v82, %v86
    %v91 = vadd.f32 %v83, %v86
    %v92 = vadd.f32 %v84, %v86
    %v93 = vadd.f32 %v85, %v86
    %v94 = vtanh.pop %v87
    %v95 = vtanh.pop %v88
    %v96 = vtanh.pop %v89
    %v97 = vtanh.pop %v90
    %v98 = vtanh.pop %v91
    %v99 = vtanh.pop %v92
    %v100 = vtanh.pop %v93
    %v101 = vpack.c.bf16 %v95, %v94
    %v102 = vpack.c.bf16 %v97, %v96
    %v103 = vpack.c.bf16 %v99, %v98
    %v104 = vpack.c.bf16 %v100, %v100
    %v105 = vld [vmem:[#allocation2] sm:$0xf]
    %v106 = vld [vmem:[#allocation2 + $0x4] sm:$0xf]
    %v107 = vld [vmem:[#allocation2 + $0x8] sm:$0xf]
    %v108 = vld [vmem:[#allocation2 + $0xc] sm:$0xf]
    %v109 = vld [vmem:[#allocation2 + $0x10] sm:$0xf]
    %v110 = vld [vmem:[#allocation2 + $0x14] sm:$0xf]
    %v111 = vld [vmem:[#allocation2 + $0x18] sm:$0xf]
    %v112 = vld [vmem:[#allocation2 + $0x1c] sm:$0xf]
    %v113 = vld [vmem:[#allocation2 + $0x20] sm:$0xf]
    %v114 = vld [vmem:[#allocation2 + $0x24] sm:$0xf]
    %v115 = vld [vmem:[#allocation2 + $0x28] sm:$0xf]
    %v116 = vld [vmem:[#allocation2 + $0x2c] sm:$0xf]
    %v117 = vld [vmem:[#allocation2 + $0x30] sm:$0xf]
    %v118 = vld [vmem:[#allocation2 + $0x34] sm:$0xf]
    %v119 = vld [vmem:[#allocation2 + $0x38] sm:$0xf]
    %v120 = vld [vmem:[#allocation2 + $0x3c] sm:$0xf]
    %v121 = vperm.slane %v32, 0
    %v138 = vunpack.c.l.b16 %v105
    %v139 = vunpack.c.l.b16 %v106
    %v140 = vunpack.c.l.b16 %v107
    %v141 = vunpack.c.l.b16 %v108
    %v142 = vunpack.c.l.b16 %v109
    %v143 = vunpack.c.l.b16 %v110
    %v144 = vunpack.c.l.b16 %v111
    %v145 = vunpack.c.l.b16 %v112
    %v146 = vunpack.c.l.b16 %v113
    %v147 = vunpack.c.l.b16 %v114
    %v148 = vunpack.c.l.b16 %v115
    %v149 = vunpack.c.l.b16 %v116
    %v150 = vunpack.c.l.b16 %v117
    %v151 = vunpack.c.l.b16 %v118
    %v152 = vunpack.c.l.b16 %v119
    %v153 = vunpack.c.l.b16 %v120
    %v154 = vpack.c.b16 %v139, %v138
    %v155 = vpack.c.b16 %v141, %v140
    %v156 = vpack.c.b16 %v143, %v142
    %v157 = vpack.c.b16 %v145, %v144
    %v158 = vpack.c.b16 %v147, %v146
    %v159 = vpack.c.b16 %v149, %v148
    %v160 = vpack.c.b16 %v151, %v150
    %v161 = vpack.c.b16 %v153, %v152
    %170 = vmatpush.bf16.msra.mxu0 %v161
    %171 = vmatpush.bf16.msra.mxu0 %v160
    %172 = vmatpush.bf16.msra.mxu0 %v159
    %173 = vmatpush.bf16.msra.mxu0 %v158
    %174 = vmatpush.bf16.msra.mxu0 %v157
    %175 = vmatpush.bf16.msra.mxu0 %v156
    %176 = vmatpush.bf16.msra.mxu0 %v155
    %177 = vmatpush.bf16.msra.mxu0 %v154
    %178 = vmatmul.bf16.gmra.mxu0 %v101
    %v179 = vpop.f32.mrf.mxu0
    %v180 = vadd.f32 %v121, %v179
    %v181 = vpop.f32.mrf.mxu0
    %v182 = vadd.f32 %v121, %v181
    %183 = vmatmul.bf16.gmra.mxu0 %v102
    %v184 = vpop.f32.mrf.mxu0
    %v185 = vadd.f32 %v121, %v184
    %v186 = vpop.f32.mrf.mxu0
    %v187 = vadd.f32 %v121, %v186
    %188 = vmatmul.bf16.gmra.mxu0 %v103
    %v189 = vpop.f32.mrf.mxu0
    %v190 = vadd.f32 %v121, %v189
    %v191 = vpop.f32.mrf.mxu0
    %v192 = vadd.f32 %v121, %v191
    %193 = vmatmul.bf16.gmra.mxu0 %v104
    %v194 = vpop.f32.mrf.mxu0
    %v195 = vadd.f32 %v121, %v194
    %v196 = vpop.f32.mrf.mxu0
    %197 = vdwg.mxu0
    %v198 = vtanh.pop %v180
    %v199 = vtanh.pop %v182
    %v200 = vtanh.pop %v185
    %v201 = vtanh.pop %v187
    %v202 = vtanh.pop %v190
    %v203 = vtanh.pop %v192
    %v204 = vtanh.pop %v195
    %v205 = vpack.c.bf16 %v199, %v198
    %v206 = vpack.c.bf16 %v201, %v200
    %v207 = vpack.c.bf16 %v203, %v202
    %v208 = vpack.c.bf16 %v204, %v204
    %s209 = scalar_lea.vmem [#allocation2], 64
    %v210 = vld [vmem:[%s209] sm:$0xf]
    %v211 = vld [vmem:[%s209 + $0x4] sm:$0xf]
    %v212 = vld [vmem:[%s209 + $0x8] sm:$0xf]
    %v213 = vld [vmem:[%s209 + $0xc] sm:$0xf]
    %v214 = vld [vmem:[%s209 + $0x10] sm:$0xf]
    %v215 = vld [vmem:[%s209 + $0x14] sm:$0xf]
    %v216 = vld [vmem:[%s209 + $0x18] sm:$0xf]
    %v217 = vld [vmem:[%s209 + $0x1c] sm:$0xf]
    %v218 = vld [vmem:[%s209 + $0x20] sm:$0xf]
    %v219 = vld [vmem:[%s209 + $0x24] sm:$0xf]
    %v220 = vld [vmem:[%s209 + $0x28] sm:$0xf]
    %v221 = vld [vmem:[%s209 + $0x2c] sm:$0xf]
    %v222 = vld [vmem:[%s209 + $0x30] sm:$0xf]
    %v223 = vld [vmem:[%s209 + $0x34] sm:$0xf]
    %v224 = vld [vmem:[%s209 + $0x38] sm:$0xf]
    %v225 = vld [vmem:[%s209 + $0x3c] sm:$0xf]
    %v226 = vperm.slane %v33, 0
    %v243 = vunpack.c.l.b16 %v210
    %v244 = vunpack.c.l.b16 %v211
    %v245 = vunpack.c.l.b16 %v212
    %v246 = vunpack.c.l.b16 %v213
    %v247 = vunpack.c.l.b16 %v214
    %v248 = vunpack.c.l.b16 %v215
    %v249 = vunpack.c.l.b16 %v216
    %v250 = vunpack.c.l.b16 %v217
    %v251 = vunpack.c.l.b16 %v218
    %v252 = vunpack.c.l.b16 %v219
    %v253 = vunpack.c.l.b16 %v220
    %v254 = vunpack.c.l.b16 %v221
    %v255 = vunpack.c.l.b16 %v222
    %v256 = vunpack.c.l.b16 %v223
    %v257 = vunpack.c.l.b16 %v224
    %v258 = vunpack.c.l.b16 %v225
    %v259 = vpack.c.b16 %v244, %v243
    %v260 = vpack.c.b16 %v246, %v245
    %v261 = vpack.c.b16 %v248, %v247
    %v262 = vpack.c.b16 %v250, %v249
    %v263 = vpack.c.b16 %v252, %v251
    %v264 = vpack.c.b16 %v254, %v253
    %v265 = vpack.c.b16 %v256, %v255
    %v266 = vpack.c.b16 %v258, %v257
    %275 = vmatpush.bf16.msra.mxu0 %v266
    %276 = vmatpush.bf16.msra.mxu0 %v265
    %277 = vmatpush.bf16.msra.mxu0 %v264
    %278 = vmatpush.bf16.msra.mxu0 %v263
    %279 = vmatpush.bf16.msra.mxu0 %v262
    %280 = vmatpush.bf16.msra.mxu0 %v261
    %281 = vmatpush.bf16.msra.mxu0 %v260
    %282 = vmatpush.bf16.msra.mxu0 %v259
    %283 = vmatmul.bf16.gmra.mxu0 %v205
    %v284 = vpop.f32.mrf.mxu0
    %v285 = vadd.f32 %v226, %v284
    %v286 = vpop.f32.mrf.mxu0
    %v287 = vadd.f32 %v226, %v286
    %288 = vmatmul.bf16.gmra.mxu0 %v206
    %v289 = vpop.f32.mrf.mxu0
    %v290 = vadd.f32 %v226, %v289
    %v291 = vpop.f32.mrf.mxu0
    %v292 = vadd.f32 %v226, %v291
    %293 = vmatmul.bf16.gmra.mxu0 %v207
    %v294 = vpop.f32.mrf.mxu0
    %v295 = vadd.f32 %v226, %v294
    %v296 = vpop.f32.mrf.mxu0
    %v297 = vadd.f32 %v226, %v296
    %298 = vmatmul.bf16.gmra.mxu0 %v208
    %v299 = vpop.f32.mrf.mxu0
    %v300 = vadd.f32 %v226, %v299
    %v301 = vpop.f32.mrf.mxu0
    %302 = vdwg.mxu0
    %v303 = vtanh.pop %v285
    %v304 = vtanh.pop %v287
    %v305 = vtanh.pop %v290
    %v306 = vtanh.pop %v292
    %v307 = vtanh.pop %v295
    %v308 = vtanh.pop %v297
    %v309 = vtanh.pop %v300
    %v310 = vpack.c.bf16 %v304, %v303
    %v311 = vpack.c.bf16 %v306, %v305
    %v312 = vpack.c.bf16 %v308, %v307
    %v313 = vpack.c.bf16 %v309, %v309
    %s314 = scalar_lea.vmem [#allocation2], 128
    %v315 = vld [vmem:[%s314] sm:$0xf]
    %v316 = vld [vmem:[%s314 + $0x4] sm:$0xf]
    %v317 = vld [vmem:[%s314 + $0x8] sm:$0xf]
    %v318 = vld [vmem:[%s314 + $0xc] sm:$0xf]
    %v319 = vld [vmem:[%s314 + $0x10] sm:$0xf]
    %v320 = vld [vmem:[%s314 + $0x14] sm:$0xf]
    %v321 = vld [vmem:[%s314 + $0x18] sm:$0xf]
    %v322 = vld [vmem:[%s314 + $0x1c] sm:$0xf]
    %v323 = vld [vmem:[%s314 + $0x20] sm:$0xf]
    %v324 = vld [vmem:[%s314 + $0x24] sm:$0xf]
    %v325 = vld [vmem:[%s314 + $0x28] sm:$0xf]
    %v326 = vld [vmem:[%s314 + $0x2c] sm:$0xf]
    %v327 = vld [vmem:[%s314 + $0x30] sm:$0xf]
    %v328 = vld [vmem:[%s314 + $0x34] sm:$0xf]
    %v329 = vld [vmem:[%s314 + $0x38] sm:$0xf]
    %v330 = vld [vmem:[%s314 + $0x3c] sm:$0xf]
    %v331 = vperm.slane %v34, 0
    %v348 = vunpack.c.l.b16 %v315
    %v349 = vunpack.c.l.b16 %v316
    %v350 = vunpack.c.l.b16 %v317
    %v351 = vunpack.c.l.b16 %v318
    %v352 = vunpack.c.l.b16 %v319
    %v353 = vunpack.c.l.b16 %v320
    %v354 = vunpack.c.l.b16 %v321
    %v355 = vunpack.c.l.b16 %v322
    %v356 = vunpack.c.l.b16 %v323
    %v357 = vunpack.c.l.b16 %v324
    %v358 = vunpack.c.l.b16 %v325
    %v359 = vunpack.c.l.b16 %v326
    %v360 = vunpack.c.l.b16 %v327
    %v361 = vunpack.c.l.b16 %v328
    %v362 = vunpack.c.l.b16 %v329
    %v363 = vunpack.c.l.b16 %v330
    %v364 = vpack.c.b16 %v349, %v348
    %v365 = vpack.c.b16 %v351, %v350
    %v366 = vpack.c.b16 %v353, %v352
    %v367 = vpack.c.b16 %v355, %v354
    %v368 = vpack.c.b16 %v357, %v356
    %v369 = vpack.c.b16 %v359, %v358
    %v370 = vpack.c.b16 %v361, %v360
    %v371 = vpack.c.b16 %v363, %v362
    %380 = vmatpush.bf16.msra.mxu0 %v371
    %381 = vmatpush.bf16.msra.mxu0 %v370
    %382 = vmatpush.bf16.msra.mxu0 %v369
    %383 = vmatpush.bf16.msra.mxu0 %v368
    %384 = vmatpush.bf16.msra.mxu0 %v367
    %385 = vmatpush.bf16.msra.mxu0 %v366
    %386 = vmatpush.bf16.msra.mxu0 %v365
    %387 = vmatpush.bf16.msra.mxu0 %v364
    %388 = vmatmul.bf16.gmra.mxu0 %v310
    %v389 = vpop.f32.mrf.mxu0
    %v390 = vadd.f32 %v331, %v389
    %v391 = vpop.f32.mrf.mxu0
    %v392 = vadd.f32 %v331, %v391
    %393 = vmatmul.bf16.gmra.mxu0 %v311
    %v394 = vpop.f32.mrf.mxu0
    %v395 = vadd.f32 %v331, %v394
    %v396 = vpop.f32.mrf.mxu0
    %v397 = vadd.f32 %v331, %v396
    %398 = vmatmul.bf16.gmra.mxu0 %v312
    %v399 = vpop.f32.mrf.mxu0
    %v400 = vadd.f32 %v331, %v399
    %v401 = vpop.f32.mrf.mxu0
    %v402 = vadd.f32 %v331, %v401
    %403 = vmatmul.bf16.gmra.mxu0 %v313
    %v404 = vpop.f32.mrf.mxu0
    %v405 = vadd.f32 %v331, %v404
    %v406 = vpop.f32.mrf.mxu0
    %407 = vdwg.mxu0
    %v408 = vtanh.pop %v390
    %v409 = vtanh.pop %v392
    %v410 = vtanh.pop %v395
    %v411 = vtanh.pop %v397
    %v412 = vtanh.pop %v400
    %v413 = vtanh.pop %v402
    %v414 = vtanh.pop %v405
    %v415 = vpack.c.bf16 %v409, %v408
    %v416 = vpack.c.bf16 %v411, %v410
    %v417 = vpack.c.bf16 %v413, %v412
    %v418 = vpack.c.bf16 %v414, %v414
    %s419 = scalar_lea.vmem [#allocation2], 192
    %v420 = vld [vmem:[%s419] sm:$0xf]
    %v421 = vld [vmem:[%s419 + $0x4] sm:$0xf]
    %v422 = vld [vmem:[%s419 + $0x8] sm:$0xf]
    %v423 = vld [vmem:[%s419 + $0xc] sm:$0xf]
    %v424 = vld [vmem:[%s419 + $0x10] sm:$0xf]
    %v425 = vld [vmem:[%s419 + $0x14] sm:$0xf]
    %v426 = vld [vmem:[%s419 + $0x18] sm:$0xf]
    %v427 = vld [vmem:[%s419 + $0x1c] sm:$0xf]
    %v428 = vld [vmem:[%s419 + $0x20] sm:$0xf]
    %v429 = vld [vmem:[%s419 + $0x24] sm:$0xf]
    %v430 = vld [vmem:[%s419 + $0x28] sm:$0xf]
    %v431 = vld [vmem:[%s419 + $0x2c] sm:$0xf]
    %v432 = vld [vmem:[%s419 + $0x30] sm:$0xf]
    %v433 = vld [vmem:[%s419 + $0x34] sm:$0xf]
    %v434 = vld [vmem:[%s419 + $0x38] sm:$0xf]
    %v435 = vld [vmem:[%s419 + $0x3c] sm:$0xf]
    %v436 = vperm.slane %v35, 0
    %v453 = vunpack.c.l.b16 %v420
    %v454 = vunpack.c.l.b16 %v421
    %v455 = vunpack.c.l.b16 %v422
    %v456 = vunpack.c.l.b16 %v423
    %v457 = vunpack.c.l.b16 %v424
    %v458 = vunpack.c.l.b16 %v425
    %v459 = vunpack.c.l.b16 %v426
    %v460 = vunpack.c.l.b16 %v427
    %v461 = vunpack.c.l.b16 %v428
    %v462 = vunpack.c.l.b16 %v429
    %v463 = vunpack.c.l.b16 %v430
    %v464 = vunpack.c.l.b16 %v431
    %v465 = vunpack.c.l.b16 %v432
    %v466 = vunpack.c.l.b16 %v433
    %v467 = vunpack.c.l.b16 %v434
    %v468 = vunpack.c.l.b16 %v435
    %v469 = vpack.c.b16 %v454, %v453
    %v470 = vpack.c.b16 %v456, %v455
    %v471 = vpack.c.b16 %v458, %v457
    %v472 = vpack.c.b16 %v460, %v459
    %v473 = vpack.c.b16 %v462, %v461
    %v474 = vpack.c.b16 %v464, %v463
    %v475 = vpack.c.b16 %v466, %v465
    %v476 = vpack.c.b16 %v468, %v467
    %485 = vmatpush.bf16.msra.mxu0 %v476
    %486 = vmatpush.bf16.msra.mxu0 %v475
    %487 = vmatpush.bf16.msra.mxu0 %v474
    %488 = vmatpush.bf16.msra.mxu0 %v473
    %489 = vmatpush.bf16.msra.mxu0 %v472
    %490 = vmatpush.bf16.msra.mxu0 %v471
    %491 = vmatpush.bf16.msra.mxu0 %v470
    %492 = vmatpush.bf16.msra.mxu0 %v469
    %493 = vmatmul.bf16.gmra.mxu0 %v415
    %v494 = vpop.f32.mrf.mxu0
    %v495 = vadd.f32 %v436, %v494
    %v496 = vpop.f32.mrf.mxu0
    %v497 = vadd.f32 %v436, %v496
    %498 = vmatmul.bf16.gmra.mxu0 %v416
    %v499 = vpop.f32.mrf.mxu0
    %v500 = vadd.f32 %v436, %v499
    %v501 = vpop.f32.mrf.mxu0
    %v502 = vadd.f32 %v436, %v501
    %503 = vmatmul.bf16.gmra.mxu0 %v417
    %v504 = vpop.f32.mrf.mxu0
    %v505 = vadd.f32 %v436, %v504
    %v506 = vpop.f32.mrf.mxu0
    %v507 = vadd.f32 %v436, %v506
    %508 = vmatmul.bf16.gmra.mxu0 %v418
    %v509 = vpop.f32.mrf.mxu0
    %v510 = vadd.f32 %v436, %v509
    %v511 = vpop.f32.mrf.mxu0
    %512 = vdwg.mxu0
    %513 = vst [vmem:[%s3] sm:$0xff] %v495
    %514 = vst [vmem:[%s3 + $0x8] sm:$0xff] %v497
    %515 = vst [vmem:[%s3 + $0x10] sm:$0xff] %v500
    %516 = vst [vmem:[%s3 + $0x18] sm:$0xff] %v502
    %517 = vst [vmem:[%s3 + $0x20] sm:$0xff] %v505
    %518 = vst [vmem:[%s3 + $0x28] sm:$0xff] %v507
    %519 = vst [vmem:[%s3 + $0x30] sm:$0xff] %v510
    // Predicated region
    $region18: #{net_forward.1} parent=1 // pred_check
      _
    $region19: #{net_forward.1} parent=1 // pred_check_branch
      %521 = sbr.rel (0) target = $region21
    $region20: #{net_forward.1} parent=1 // pred_region
      _
    $region21: #{net_forward.1} parent=1 // pred_fallthru
      _
    // Predicated region
    $region22: #{net_forward.1} parent=1 // pred_check
      _
    $region23: #{net_forward.1} parent=1 // pred_check_branch
      %523 = sbr.rel (0) target = $region25
    $region24: #{net_forward.1} parent=1 // pred_region
      _
    $region25: #{net_forward.1} parent=1 // pred_fallthru
      _
    %524 = vsyncpa [#allocation3], 1

</llo_original>
